<compile_context>
chip_gen: v6e
topology: v6e:2x2x1
jax: 0.10.0
libtpu: 0.0.40
codegen_flags: <defaults>
</compile_context>

<pallas_src>
import functools

import jax
import jax.numpy as jnp
from jax import lax
from jax.experimental import pallas as pl
from jax.experimental.pallas import tpu as pltpu


def _round_up(x, m):
    return ((x + m - 1) // m) * m


def _round_down(x, m):
    return (x // m) * m


# ---------------------------------------------------------------------------
# Kernel A: lane-tiled (C, TN) layout — used when H*W is not a multiple of 128.
# ---------------------------------------------------------------------------
def _dice_partial_kernel_lanes(logits_ref, labels_ref, out_ref, *,
                               hw_valid, tile_n):
    """One (batch, spatial-tile) block: per-class partial [inter, card] sums."""
    j = pl.program_id(1)
    n_j = pl.num_programs(1)
    has_remainder = (hw_valid % tile_n) != 0          # static

    def body(masked):
        logits = logits_ref[...].astype(jnp.float32)   # (C, TN) widen in-vreg
        labels = labels_ref[...].astype(jnp.int32)     # (1, TN) widen in-vreg
        if masked:
            col = lax.broadcasted_iota(jnp.int32, labels.shape, 1) + j * tile_n
            valid = col < hw_valid                     # (1, TN) bool
            # Mask raw logits BEFORE exp: stale OOB lanes may hold inf/NaN.
            logits = jnp.where(valid, logits, 0.0)
            labels = jnp.where(valid, labels, -1)      # -1 never matches a class

        # Numerically-stable softmax over the channel axis.
        m = jnp.max(logits, axis=0, keepdims=True)
        e = jnp.exp(logits - m)
        denom = jnp.sum(e, axis=0, keepdims=True)
        probs = e * pl.reciprocal(denom, approx=True)  # EUP vrcp
        if masked:
            probs = probs * valid.astype(jnp.float32)  # zero padded lanes

        class_ids = lax.broadcasted_iota(jnp.int32, logits.shape, 0)
        one_hot = (class_ids == labels).astype(jnp.float32)

        inter = jnp.sum(probs * one_hot, axis=1, keepdims=True)   # (C, 1)
        card = jnp.sum(probs + one_hot, axis=1, keepdims=True)    # (C, 1)
        out_ref[:, 0:1] = inter
        out_ref[:, 1:2] = card

    if not has_remainder:
        body(masked=False)
    else:
        @pl.when(j != n_j - 1)
        def _():
            body(masked=False)

        @pl.when(j == n_j - 1)
        def _():
            body(masked=True)


# ---------------------------------------------------------------------------
# Kernel B: sublane-packed (C, TR, 128) layout — used when H*W % 128 == 0.
# Keeps vregs fully dense for small C (softmax over C is pure per-element VALU).
# ---------------------------------------------------------------------------
def _dice_partial_kernel_packed(logits_ref, labels_ref, out_ref, *,
                                rows_valid, tile_r):
    j = pl.program_id(1)
    n_j = pl.num_programs(1)
    has_remainder = (rows_valid % tile_r) != 0        # static

    def body(masked):
        logits = logits_ref[...].astype(jnp.float32)   # (C, TR, 128)
        labels = labels_ref[...].astype(jnp.int32)     # (1, TR, 128)
        if masked:
            row = lax.broadcasted_iota(jnp.int32, labels.shape, 1) + j * tile_r
            valid = row < rows_valid                   # (1, TR, 128) bool
            logits = jnp.where(valid, logits, 0.0)
            labels = jnp.where(valid, labels, -1)

        m = jnp.max(logits, axis=0, keepdims=True)
        e = jnp.exp(logits - m)
        denom = jnp.sum(e, axis=0, keepdims=True)
        probs = e * pl.reciprocal(denom, approx=True)
        if masked:
            probs = probs * valid.astype(jnp.float32)

        class_ids = lax.broadcasted_iota(jnp.int32, logits.shape, 0)
        one_hot = (class_ids == labels).astype(jnp.float32)

        inter = jnp.sum(jnp.sum(probs * one_hot, axis=2), axis=1, keepdims=True)
        card = jnp.sum(jnp.sum(probs + one_hot, axis=2), axis=1, keepdims=True)
        out_ref[:, 0:1] = inter                         # (C, 1)
        out_ref[:, 1:2] = card                          # (C, 1)

    if not has_remainder:
        body(masked=False)
    else:
        @pl.when(j != n_j - 1)
        def _():
            body(masked=False)

        @pl.when(j == n_j - 1)
        def _():
            body(masked=True)


# ---------------------------------------------------------------------------
# Wrapper
# ---------------------------------------------------------------------------
def dice_loss(logits, true, *, smooth=1e-6,
              block_budget_bytes=4 * 1024 * 1024,   # ~4 MiB of logits per block
              min_grid_steps=4):
    """logits: [B, C, H, W] float32/bf16, true: [B, H, W] int -> scalar loss."""
    B, C, H, W = logits.shape
    HW = H * W

    # Pass narrow integer label dtypes straight through (a wrapper cast would
    # be its own HBM pass); widen in-vreg inside the kernel.
    if not jnp.issubdtype(true.dtype, jnp.integer):
        true = true.astype(jnp.int32)

    logit_bytes = jnp.dtype(logits.dtype).itemsize
    label_bytes = jnp.dtype(true.dtype).itemsize

    packed = (HW % 128 == 0)

    if packed:
        R = HW // 128
        # Row-tile size from the VMEM budget (multiple of 8 sublanes).
        tr_budget = max(8, _round_down(
            block_budget_bytes // (logit_bytes * C * 128), 8))
        tr = R if R <= tr_budget else tr_budget
        n_tiles = pl.cdiv(R, tr)
        # Keep enough grid steps for pipeline overlap / megacore balance.
        while B * n_tiles < min_grid_steps:
            new_tr = max(8, _round_up((tr + 1) // 2, 8))
            if new_tr >= tr:
                break
            tr = new_tr
            n_tiles = pl.cdiv(R, tr)
        logits_in = logits.reshape(B, C, R, 128)        # free reshape
        labels_in = true.reshape(B, 1, R, 128)
        kernel = functools.partial(_dice_partial_kernel_packed,
                                   rows_valid=R, tile_r=tr)
        in_specs = [
            pl.BlockSpec((None, C, tr, 128), lambda b, j: (b, 0, j, 0)),
            pl.BlockSpec((None, 1, tr, 128), lambda b, j: (b, 0, j, 0)),
        ]
        logits_blk_bytes = C * tr * 128 * logit_bytes
        labels_blk_bytes = tr * 128 * label_bytes
    else:
        # Lane-dense spatial tile from the VMEM budget (multiple of 128).
        tn_budget = max(128, _round_down(
            block_budget_bytes // (logit_bytes * C), 128))
        tn = min(tn_budget, _round_up(HW, 128))
        n_tiles = pl.cdiv(HW, tn)
        while B * n_tiles < min_grid_steps:
            new_tn = max(128, _round_up((tn + 1) // 2, 128))
            if new_tn >= tn:
                break
            tn = new_tn
            n_tiles = pl.cdiv(HW, tn)
        logits_in = logits.reshape(B, C, HW)             # free reshape, no pad
        labels_in = true.reshape(B, 1, HW)
        kernel = functools.partial(_dice_partial_kernel_lanes,
                                   hw_valid=HW, tile_n=tn)
        in_specs = [
            pl.BlockSpec((None, C, tn), lambda b, j: (b, 0, j)),
            pl.BlockSpec((None, 1, tn), lambda b, j: (b, 0, j)),
        ]
        logits_blk_bytes = C * tn * logit_bytes
        labels_blk_bytes = tn * label_bytes

    # Double-buffered inputs + tiny outputs + slack.  Raise v5e's 16 MiB
    # default scoped limit when needed, but stay <= 40 MiB for v7x's 64 MiB/TC.
    vmem_need = 2 * (logits_blk_bytes + labels_blk_bytes) + (2 << 20)
    vmem_limit = int(min(max(vmem_need, 32 << 20), 40 << 20))

    part_shape = (B, n_tiles, C, 2)                      # fused [inter, card]
    parts = pl.pallas_call(
        kernel,
        out_shape=jax.ShapeDtypeStruct(part_shape, jnp.float32),
        grid=(B, n_tiles),
        in_specs=in_specs,
        out_specs=pl.BlockSpec((None, None, C, 2), lambda b, j: (b, j, 0, 0)),
        compiler_params=pltpu.CompilerParams(
            dimension_semantics=("parallel", "parallel"),
            vmem_limit_bytes=vmem_limit,
        ),
    )(logits_in, labels_in)

    # Tiny final reduction + dice in plain JAX (negligible cost).
    sums = jnp.sum(parts, axis=(0, 1))                   # (C, 2)
    inter = sums[:, 0]
    card = sums[:, 1]
    dice = (2.0 * inter + smooth) / (card + smooth)
    return 1.0 - jnp.mean(dice)


def dice_loss_ref(logits, true, smooth=1e-6):
    """Pure-JAX reference matching the PyTorch DiceLoss."""
    probs = jax.nn.softmax(logits.astype(jnp.float32), axis=1)     # [B,C,H,W]
    C = probs.shape[1]
    one_hot = jax.nn.one_hot(true, C, dtype=jnp.float32)           # [B,H,W,C]
    one_hot = jnp.transpose(one_hot, (0, 3, 1, 2))                 # [B,C,H,W]
    dims = (0, 2, 3)
    inter = jnp.sum(probs * one_hot, axis=dims)
    card = jnp.sum(probs + one_hot, axis=dims)
    dice = (2.0 * inter + smooth) / (card + smooth)
    return 1.0 - jnp.mean(dice)


if __name__ == "__main__":
    key = jax.random.PRNGKey(0)
    k1, k2, k3, k4 = jax.random.split(key, 4)

    # Aligned spatial size (H*W % 128 == 0): exercises the sublane-packed path.
    B, C, H, W = 2, 4, 16, 16
    logits = jax.random.normal(k1, (B, C, H, W), dtype=jnp.float32)
    true = jax.random.randint(k2, (B, H, W), 0, C, dtype=jnp.int32)
    loss = jax.block_until_ready(dice_loss(logits, true))
    ref = jax.block_until_ready(dice_loss_ref(logits, true))
    assert jnp.allclose(loss, ref, atol=2e-3, rtol=2e-3), (loss, ref)

    # Unaligned spatial size: exercises the lane-tiled path with an in-kernel
    # masked partial last block (no wrapper-side jnp.pad HBM round trip).
    H2, W2 = 15, 15
    logits2 = jax.random.normal(k3, (B, C, H2, W2), dtype=jnp.float32)
    true2 = jax.random.randint(k4, (B, H2, W2), 0, C, dtype=jnp.int32)
    loss2 = jax.block_until_ready(dice_loss(logits2, true2))
    ref2 = jax.block_until_ready(dice_loss_ref(logits2, true2))
    assert jnp.allclose(loss2, ref2, atol=2e-3, rtol=2e-3), (loss2, ref2)

    print("KERNEL_OK")
</pallas_src>

<mosaic_0001>
module attributes {stable_mosaic.version = 11 : i64} {
  func.func @_dice_partial_kernel_packed(%arg0: i32, %arg1: i32, %arg2: memref<1x4x2x128xf32, #tpu.memory_space<vmem>>, %arg3: memref<1x1x2x128xi32, #tpu.memory_space<vmem>>, %arg4: memref<1x1x4x2xf32, #tpu.memory_space<vmem>>) attributes {dimension_semantics = [#tpu.dimension_semantics<parallel>, #tpu.dimension_semantics<parallel>], iteration_bounds = array<i64: 2, 1>, scalar_prefetch = 0 : i64, scratch_operands = 0 : i64, tpu.core_type = #tpu.core_type<tc>, window_params = [{transform_indices = @transform_0, window_bounds = array<i64: 1, 4, 2, 128>}, {transform_indices = @transform_1, window_bounds = array<i64: 1, 1, 2, 128>}, {transform_indices = @transform_2, window_bounds = array<i64: 1, 1, 4, 2>}]} {
    %c0 = arith.constant 0 : index
    %c0_0 = arith.constant 0 : index
    %c0_1 = arith.constant 0 : index
    %c0_2 = arith.constant 0 : index
    %0 = vector.load %arg2[%c0, %c0_0, %c0_1, %c0_2] : memref<1x4x2x128xf32, #tpu.memory_space<vmem>>, vector<1x4x2x128xf32>
    %1 = vector.shape_cast %0 : vector<1x4x2x128xf32> to vector<4x2x128xf32>
    %c0_3 = arith.constant 0 : index
    %c0_4 = arith.constant 0 : index
    %c0_5 = arith.constant 0 : index
    %c0_6 = arith.constant 0 : index
    %2 = vector.load %arg3[%c0_3, %c0_4, %c0_5, %c0_6] : memref<1x1x2x128xi32, #tpu.memory_space<vmem>>, vector<1x1x2x128xi32>
    %3 = vector.shape_cast %2 : vector<1x1x2x128xi32> to vector<1x2x128xi32>
    %cst = arith.constant dense<0xFF800000> : vector<2x128xf32>
    %4 = vector.multi_reduction <maximumf>, %1, %cst [0] : vector<4x2x128xf32> to vector<2x128xf32>
    %5 = vector.shape_cast %4 : vector<2x128xf32> to vector<1x2x128xf32>
    %6 = vector.broadcast %5 : vector<1x2x128xf32> to vector<4x2x128xf32>
    %7 = arith.subf %1, %6 : vector<4x2x128xf32>
    %8 = math.exp %7 : vector<4x2x128xf32>
    %cst_7 = arith.constant dense<0.000000e+00> : vector<2x128xf32>
    %9 = vector.multi_reduction <add>, %8, %cst_7 [0] : vector<4x2x128xf32> to vector<2x128xf32>
    %10 = vector.shape_cast %9 : vector<2x128xf32> to vector<1x2x128xf32>
    %11 = tpu.reciprocal %10 {approx = true} : vector<1x2x128xf32> -> vector<1x2x128xf32>
    %12 = vector.broadcast %11 : vector<1x2x128xf32> to vector<4x2x128xf32>
    %13 = arith.mulf %8, %12 : vector<4x2x128xf32>
    %14 = tpu.iota {dimensions = array<i32: 0>} : vector<4x2x128xi32>
    %15 = vector.broadcast %3 : vector<1x2x128xi32> to vector<4x2x128xi32>
    %16 = arith.cmpi eq, %14, %15 : vector<4x2x128xi32>
    %17 = arith.extui %16 : vector<4x2x128xi1> to vector<4x2x128xi32>
    %18 = arith.sitofp %17 : vector<4x2x128xi32> to vector<4x2x128xf32>
    %19 = arith.mulf %13, %18 : vector<4x2x128xf32>
    %cst_8 = arith.constant dense<0.000000e+00> : vector<4x2xf32>
    %20 = vector.multi_reduction <add>, %19, %cst_8 [2] : vector<4x2x128xf32> to vector<4x2xf32>
    %cst_9 = arith.constant dense<0.000000e+00> : vector<4xf32>
    %21 = vector.multi_reduction <add>, %20, %cst_9 [1] : vector<4x2xf32> to vector<4xf32>
    %22 = vector.shape_cast %21 : vector<4xf32> to vector<4x1xf32>
    %23 = arith.addf %13, %18 : vector<4x2x128xf32>
    %cst_10 = arith.constant dense<0.000000e+00> : vector<4x2xf32>
    %24 = vector.multi_reduction <add>, %23, %cst_10 [2] : vector<4x2x128xf32> to vector<4x2xf32>
    %cst_11 = arith.constant dense<0.000000e+00> : vector<4xf32>
    %25 = vector.multi_reduction <add>, %24, %cst_11 [1] : vector<4x2xf32> to vector<4xf32>
    %26 = vector.shape_cast %25 : vector<4xf32> to vector<4x1xf32>
    %c0_12 = arith.constant 0 : index
    %c0_13 = arith.constant 0 : index
    %c0_14 = arith.constant 0 : index
    %c0_15 = arith.constant 0 : index
    %27 = vector.load %arg4[%c0_12, %c0_13, %c0_14, %c0_15] : memref<1x1x4x2xf32, #tpu.memory_space<vmem>>, vector<1x1x4x1xf32>
    %28 = vector.shape_cast %27 : vector<1x1x4x1xf32> to vector<4x1xf32>
    %29 = vector.shape_cast %22 : vector<4x1xf32> to vector<1x1x4x1xf32>
    tpu.vector_store %arg4[%c0_12, %c0_13, %c0_14, %c0_15], %29 {strides = array<i32>} : memref<1x1x4x2xf32, #tpu.memory_space<vmem>>, vector<1x1x4x1xf32>,
    %c0_16 = arith.constant 0 : index
    %c0_17 = arith.constant 0 : index
    %c0_18 = arith.constant 0 : index
    %c1 = arith.constant 1 : index
    %30 = vector.load %arg4[%c0_16, %c0_17, %c0_18, %c1] : memref<1x1x4x2xf32, #tpu.memory_space<vmem>>, vector<1x1x4x1xf32>
    %31 = vector.shape_cast %30 : vector<1x1x4x1xf32> to vector<4x1xf32>
    %32 = vector.shape_cast %26 : vector<4x1xf32> to vector<1x1x4x1xf32>
    tpu.vector_store %arg4[%c0_16, %c0_17, %c0_18, %c1], %32 {strides = array<i32>} : memref<1x1x4x2xf32, #tpu.memory_space<vmem>>, vector<1x1x4x1xf32>,
    return
  }
  func.func @transform_0(%arg0: i32, %arg1: i32) -> (i32, i32, i32, i32) {
    %c0_i32 = arith.constant 0 : i32
    %c0_i32_0 = arith.constant 0 : i32
    %c0_i32_1 = arith.constant 0 : i32
    return %arg0, %c0_i32, %arg1, %c0_i32_0 : i32, i32, i32, i32
  }
  func.func @transform_1(%arg0: i32, %arg1: i32) -> (i32, i32, i32, i32) {
    %c0_i32 = arith.constant 0 : i32
    %c0_i32_0 = arith.constant 0 : i32
    %c0_i32_1 = arith.constant 0 : i32
    return %arg0, %c0_i32, %arg1, %c0_i32_0 : i32, i32, i32, i32
  }
  func.func @transform_2(%arg0: i32, %arg1: i32) -> (i32, i32, i32, i32) {
    %c0_i32 = arith.constant 0 : i32
    %c0_i32_0 = arith.constant 0 : i32
    %c0_i32_1 = arith.constant 0 : i32
    return %arg0, %arg1, %c0_i32, %c0_i32_0 : i32, i32, i32, i32
  }
}

</mosaic_0001>

<llo_original>
// kernel: tpu_custom_call.1
$region0: #{tpu_custom_call.1}
  #allocation0 [shape = 'u32[]', space=smem, size = 0x4, offset = 0x4, fixed_abs, tag = 'smem constant byte address 0x4 - core index']
  #allocation1 [shape = 'u32[144,128]{1,0:T(1,128)}', space=vmem, size = 0x12000, scoped, tag = 'internal scratch']
  %s0 = inlined_call_operand.hbm [shape: f32[2,4,2,128], index: 0, kind: input, shape index: {}]
  %s1 = inlined_call_operand.hbm [shape: s32[2,1,2,128], index: 1, kind: input, shape index: {}]
  %s2 = inlined_call_operand.vmem [shape: f32[2,1,4,2], index: 2, kind: output, shape index: {}]
  %s3 = sld [smem:[#allocation0]]
  $region49: #{tpu_custom_call.1} parent=0
    _
  %s5 = ssub.s32 1, %s3
  %s6 = scalar_select 0, %s5, %s3
  $region1: #{tpu_custom_call.1} parent=0
    #allocation2 [shape = 'u8[8192]{0}', space=vmem, size = 0x2000, scoped, tag = 'input window, operand 0']
    #allocation3 [shape = 's32[2]{0}', space=sflag, size = 0x8, scoped, tag = 'scoped memory for tpu_custom_call.1']
    #allocation4 [shape = 'u8[2048]{0}', space=vmem, size = 0x800, scoped, tag = 'input window, operand 1']
    #allocation5 [shape = 's32[2]{0}', space=sflag, size = 0x8, scoped, tag = 'scoped memory for tpu_custom_call.1']
    %7 = vsyncpa [#allocation3], 0
    %s8 = scalar_lea.sflag [#allocation3], 1
    %9 = vsyncpa %s8, 0
    %10 = vsyncpa [#allocation5], 0
    %s11 = scalar_lea.sflag [#allocation5], 1
    %12 = vsyncpa %s11, 0
    loop: start=0, step=1, limit=4
    $region2: #{tpu_custom_call.1} parent=1 // loop_pre_header
      _
    $region3: #{tpu_custom_call.1} parent=1 // loop_header
      %s14 = sphi 0, %s18
      %p15 = scmp.ge.s32.totalorder %s14, 4
      %s21 = sphi 0, %s33
      %s22 = sphi 0, %s29
      %s23 = sphi 0, %s21
      %s24 = sphi 0, %s22
      %s25 = sphi 0, %s23
      %s26 = sphi 0, %s24
      %s38 = sphi 0, %s40
      %s41 = sphi 0, %s38
      %s42 = sphi 0, %s41
      %s58 = sphi 0, %s42
      %s66 = sphi 0, %s68
      %s69 = sphi 0, %s66
      %s70 = sphi 0, %s69
      %s86 = sphi 0, %s70
      %s94 = sphi 0, %s96
      %s97 = sphi 0, %s94
      %s98 = sphi 0, %s97
      %s114 = sphi 0, %s98
    $region4: #{tpu_custom_call.1} parent=1 // loop_header_branch
      %17 = sbr.rel (%p15) target = $region8
    $region5: #{tpu_custom_call.1} parent=1 // loop_body
      %s19 = ssub.s32 %s14, 1
      %s20 = ssub.s32 %s14, 2
      %s27 = sadd.s32 1, %s22
      %p28 = scmp.ge.s32.totalorder %s27, 1
      %s29 = scalar_select %p28, 0, %s27
      %s30 = sadd.s32 1, %s21
      %s31 = scalar_select %p28, %s30, %s21
      %p32 = scmp.ge.s32.totalorder %s31, 2
      %s33 = scalar_select %p32, 0, %s31
      %s34 = ssub.s32 %s21, %s33
      %s35 = ssub.s32 %s22, %s29
      %s36 = sor.u32 %s34, %s35
      %p37 = scmp.eq.s32.totalorder %s36, 0
      %s39 = sadd.s32 %s38, 1
      %s40 = scalar_select %p37, %s38, %s39
      %p43 = pneg %p37
      %p44 = scmp.eq.s32.totalorder %s14, 1
      %p45 = por %p43, %p44
      %p46 = scmp.ne.s32.totalorder %s38, %s41
      %p47 = scmp.eq.s32.totalorder %s14, 0
      %p48 = por %p46, %p47
      %p49 = scmp.ne.s32.totalorder %s38, %s41
      %p50 = scmp.eq.s32.totalorder %s19, 1
      %p51 = por %p49, %p50
      %p52 = scmp.ne.s32.totalorder %s41, %s42
      %p53 = scmp.eq.s32.totalorder %s19, 0
      %p54 = por %p52, %p53
      %p55 = scmp.ne.s32.totalorder %s41, %s42
      %p56 = scmp.eq.s32.totalorder %s20, 1
      %p57 = por %p55, %p56
      %p59 = scmp.ne.s32.totalorder %s42, %s58
      %p60 = scmp.eq.s32.totalorder %s20, 0
      %p61 = por %p59, %p60
      %s62 = ssub.s32 %s21, %s33
      %s63 = ssub.s32 %s22, %s29
      %s64 = sor.u32 %s62, %s63
      %p65 = scmp.eq.s32.totalorder %s64, 0
      %s67 = sadd.s32 %s66, 1
      %s68 = scalar_select %p65, %s66, %s67
      %p71 = pneg %p65
      %p72 = scmp.eq.s32.totalorder %s14, 1
      %p73 = por %p71, %p72
      %p74 = scmp.ne.s32.totalorder %s66, %s69
      %p75 = scmp.eq.s32.totalorder %s14, 0
      %p76 = por %p74, %p75
      %p77 = scmp.ne.s32.totalorder %s66, %s69
      %p78 = scmp.eq.s32.totalorder %s19, 1
      %p79 = por %p77, %p78
      %p80 = scmp.ne.s32.totalorder %s69, %s70
      %p81 = scmp.eq.s32.totalorder %s19, 0
      %p82 = por %p80, %p81
      %p83 = scmp.ne.s32.totalorder %s69, %s70
      %p84 = scmp.eq.s32.totalorder %s20, 1
      %p85 = por %p83, %p84
      %p87 = scmp.ne.s32.totalorder %s70, %s86
      %p88 = scmp.eq.s32.totalorder %s20, 0
      %p89 = por %p87, %p88
      %s90 = ssub.s32 %s21, %s33
      %s91 = ssub.s32 %s22, %s29
      %s92 = sor.u32 %s90, %s91
      %p93 = scmp.eq.s32.totalorder %s92, 0
      %s95 = sadd.s32 %s94, 1
      %s96 = scalar_select %p93, %s94, %s95
      %p99 = pneg %p93
      %p100 = scmp.eq.s32.totalorder %s14, 1
      %p101 = por %p99, %p100
      %p102 = scmp.ne.s32.totalorder %s94, %s97
      %p103 = scmp.eq.s32.totalorder %s14, 0
      %p104 = por %p102, %p103
      %p105 = scmp.ne.s32.totalorder %s94, %s97
      %p106 = scmp.eq.s32.totalorder %s19, 1
      %p107 = por %p105, %p106
      %p108 = scmp.ne.s32.totalorder %s97, %s98
      %p109 = scmp.eq.s32.totalorder %s19, 0
      %p110 = por %p108, %p109
      %p111 = scmp.ne.s32.totalorder %s97, %s98
      %p112 = scmp.eq.s32.totalorder %s20, 1
      %p113 = por %p111, %p112
      %p115 = scmp.ne.s32.totalorder %s98, %s114
      %p116 = scmp.eq.s32.totalorder %s20, 0
      %p117 = por %p115, %p116
      %p118 = scmp.le.s32.totalorder 1, %s14
      %p119 = scmp.lt.s32.totalorder %s14, 3
      %p120 = pnand %p118, %p119
      %p121 = pneg %p120
      // Predicated region
      $region9: #{tpu_custom_call.1} parent=5 // pred_check
        _
      $region10: #{tpu_custom_call.1} parent=5 // pred_check_branch
        %123 = sbr.rel (%p120) target = $region12
      $region11: #{tpu_custom_call.1} parent=5 // pred_region
        %s124 = ssub.s32 %s14, 1
      $region12: #{tpu_custom_call.1} parent=5 // pred_fallthru
        _
      %p125 = scmp.lt.s32.totalorder %s14, 2
      // Predicated region
      $region13: #{tpu_custom_call.1} parent=5 // pred_check
        %p126 = pneg %p125
      $region14: #{tpu_custom_call.1} parent=5 // pred_check_branch
        %128 = sbr.rel (%p126) target = $region16
      $region15: #{tpu_custom_call.1} parent=5 // pred_region
        // Predicated region
        $region17: #{tpu_custom_call.1} parent=15 // pred_check
          %p129 = pneg %p48
        $region18: #{tpu_custom_call.1} parent=15 // pred_check_branch
          %131 = sbr.rel (%p129) target = $region20
        $region19: #{tpu_custom_call.1} parent=15 // pred_region
          %s132 = sand.u32 %s38, 1
          %s133 = scalar_lea.sflag [#allocation3], %s132
          %s134 = sand.u32 %s38, 1
          %s135 = smul.addr %s134, 8
          %s136 = scalar_lea.vmem [#allocation2], %s135
          %s138 = ssub.s32 128, 128
          %139 = vsyncadd %s133, %s138
          %s140 = smul.addr %s21, 4
          %s141 = sadd.s32 %s22, %s140
          %s142 = smul.addr %s141, 32
          %s143 = scalar_lea.hbm %s0, %s142
          %s144 = sshll.u32 %s136, 4
          %s145 = int_to_ptr.vmem [resolvable:$true] %s144
          %150 = dma.hbm_to_vmem [thread:$0]  %s143, 128, %s145, %s133, 32, 32, 2
        $region20: #{tpu_custom_call.1} parent=15 // pred_fallthru
          _
        // Predicated region
        $region21: #{tpu_custom_call.1} parent=15 // pred_check
          %p151 = pneg %p76
        $region22: #{tpu_custom_call.1} parent=15 // pred_check_branch
          %153 = sbr.rel (%p151) target = $region24
        $region23: #{tpu_custom_call.1} parent=15 // pred_region
          %s154 = sand.u32 %s66, 1
          %s155 = scalar_lea.sflag [#allocation5], %s154
          %s156 = sand.u32 %s66, 1
          %s157 = smul.addr %s156, 2
          %s158 = scalar_lea.vmem [#allocation4], %s157
          %s160 = ssub.s32 32, 32
          %161 = vsyncadd %s155, %s160
          %s162 = sadd.s32 %s22, %s21
          %s163 = smul.addr %s162, 32
          %s164 = scalar_lea.hbm %s1, %s163
          %s166 = sshll.u32 %s158, 4
          %s167 = int_to_ptr.vmem [resolvable:$true] %s166
          %169 = dma.hbm_to_vmem [thread:$0]  %s164, 32, %s167, %s155
        $region24: #{tpu_custom_call.1} parent=15 // pred_fallthru
          _
      $region16: #{tpu_custom_call.1} parent=5 // pred_fallthru
        _
      %p170 = scmp.le.s32.totalorder 1, %s14
      %p171 = scmp.lt.s32.totalorder %s14, 3
      %p172 = pnand %p170, %p171
      %p173 = pneg %p172
      // Predicated region
      $region25: #{tpu_custom_call.1} parent=5 // pred_check
        _
      $region26: #{tpu_custom_call.1} parent=5 // pred_check_branch
        %175 = sbr.rel (%p172) target = $region28
      $region27: #{tpu_custom_call.1} parent=5 // pred_region
        %s176 = ssub.s32 %s14, 1
        %s177 = sand.u32 %s41, 1
        %s178 = scalar_lea.sflag [#allocation3], %s177
        %s179 = sand.u32 %s41, 1
        %s180 = smul.addr %s179, 8
        %s181 = scalar_lea.vmem [#allocation2], %s180
        // Predicated region
        $region29: #{tpu_custom_call.1} parent=27 // pred_check
          %p182 = pneg %p54
        $region30: #{tpu_custom_call.1} parent=27 // pred_check_branch
          %184 = sbr.rel (%p182) target = $region32
        $region31: #{tpu_custom_call.1} parent=27 // pred_region
          %185 = dma.done %s178, 128
        $region32: #{tpu_custom_call.1} parent=27 // pred_fallthru
          _
        %s186 = sand.u32 %s69, 1
        %s187 = scalar_lea.sflag [#allocation5], %s186
        %s188 = sand.u32 %s69, 1
        %s189 = smul.addr %s188, 2
        %s190 = scalar_lea.vmem [#allocation4], %s189
        // Predicated region
        $region33: #{tpu_custom_call.1} parent=27 // pred_check
          %p191 = pneg %p82
        $region34: #{tpu_custom_call.1} parent=27 // pred_check_branch
          %193 = sbr.rel (%p191) target = $region36
        $region35: #{tpu_custom_call.1} parent=27 // pred_region
          %194 = dma.done %s187, 32
        $region36: #{tpu_custom_call.1} parent=27 // pred_fallthru
          _
        %s195 = sand.u32 %s41, 1
        %s196 = scalar_lea.sflag [#allocation3], %s195
        %s197 = sand.u32 %s41, 1
        %s198 = smul.addr %s197, 8
        %s199 = scalar_lea.vmem [#allocation2], %s198
        %p200 = pneg %p54
        %p201 = pneg %p51
        %s202 = sand.u32 %s69, 1
        %s203 = scalar_lea.sflag [#allocation5], %s202
        %s204 = sand.u32 %s69, 1
        %s205 = smul.addr %s204, 2
        %s206 = scalar_lea.vmem [#allocation4], %s205
        %p207 = pneg %p82
        %p208 = pneg %p79
        %p209 = pneg %p110
        %p210 = pneg %p107
        %p211 = scmp.lt.s32.totalorder %s23, 1
        %s212 = scalar_select %p211, %s23, 1
        %p213 = scmp.lt.s32.totalorder %s24, 0
        %s214 = scalar_select %p213, %s24, 0
        %s215 = sadd.s32 %s214, %s212
        %s216 = smul.addr %s215, 4
        %s217 = scalar_lea.vmem %s2, %s216
        %p218 = scmp.lt.s32.totalorder %s23, 1
        %s219 = scalar_select %p218, %s23, 1
        %p220 = scmp.lt.s32.totalorder %s24, 0
        %s221 = scalar_select %p220, %s24, 0
        %s222 = sadd.s32 %s221, %s219
        %s223 = smul.addr %s222, 4
        %s224 = scalar_lea.vmem %s2, %s223
        %v225 = vld [vmem:[%s181] sm:$0x3]
        %v226 = vld [vmem:[%s181 + $0x2] sm:$0x3]
        %v227 = vld [vmem:[%s181 + $0x4] sm:$0x3]
        %v228 = vld [vmem:[%s181 + $0x6] sm:$0x3]
        %v229 = vld [vmem:[%s190] sm:$0x3]
        %vm230 = vcmask 1041408
        %v231 = vsel %vm230, %v225, -inf
        %v232 = vsel %vm230, %v226, -inf
        %v233 = vsel %vm230, %v227, -inf
        %v234 = vsel %vm230, %v228, -inf
        %v235 = vmax.f32 %v231, %v232
        %v236 = vmax.f32 %v233, %v234
        %v237 = vmax.f32 %v235, %v236
        %v238 = vsub.f32 %v225, %v237
        %v239 = vsub.f32 %v226, %v237
        %v240 = vsub.f32 %v227, %v237
        %v241 = vsub.f32 %v228, %v237
        %v242 = vmul.f32 %v238, 1.442695
        %v243 = vpow.pop %v242
        %v244 = vmul.f32 %v239, 1.442695
        %v245 = vpow.pop %v244
        %v246 = vmul.f32 %v240, 1.442695
        %v247 = vpow.pop %v246
        %v248 = vmul.f32 %v241, 1.442695
        %v249 = vpow.pop %v248
        %v250 = vsel %vm230, %v243, 0.0
        %v251 = vsel %vm230, %v245, 0.0
        %v252 = vadd.f32 %v250, %v251
        %v253 = vsel %vm230, %v247, 0.0
        %v254 = vadd.f32 %v252, %v253
        %v255 = vsel %vm230, %v249, 0.0
        %v256 = vadd.f32 %v254, %v255
        %v257 = vrcp.pop %v256
        %v258 = vmul.f32 %v243, %v257
        %v259 = vmul.f32 %v245, %v257
        %v260 = vmul.f32 %v247, %v257
        %v261 = vmul.f32 %v249, %v257
        %vm262 = vcmp.eq.s32.totalorder %v229, 0
        %vm263 = vcmp.eq.s32.totalorder %v229, 1
        %vm264 = vcmp.eq.s32.totalorder %v229, 2
        %vm265 = vcmp.eq.s32.totalorder %v229, 3
        %v266 = vsel %vm262, 1, 0
        %v267 = vsel %vm263, 1, 0
        %v268 = vsel %vm264, 1, 0
        %v269 = vsel %vm265, 1, 0
        %v270 = vcvt.s32.f32 %v266
        %v271 = vcvt.s32.f32 %v267
        %v272 = vcvt.s32.f32 %v268
        %v273 = vcvt.s32.f32 %v269
        %v274 = vmul.f32 %v258, %v270
        %v275 = vmul.f32 %v259, %v271
        %v276 = vmul.f32 %v260, %v272
        %v277 = vmul.f32 %v261, %v273
        %v278 = vsel %vm230, %v274, 0.0
        %279 = vadd.xlane.f32.xlu0 %v278
        %v280 = vpop.xlane.xlu0 %279
        %v281 = vsel %vm230, %v275, 0.0
        %282 = vadd.xlane.f32.xlu0 %v281
        %v283 = vpop.xlane.xlu0 %282
        %v284 = vsel %vm230, %v276, 0.0
        %285 = vadd.xlane.f32.xlu0 %v284
        %v286 = vpop.xlane.xlu0 %285
        %v287 = vsel %vm230, %v277, 0.0
        %288 = vadd.xlane.f32.xlu0 %v287
        %v289 = vpop.xlane.xlu0 %288
        %v294 = vlaneseq
        %v295 = vand.u32 %v294, 127
        %v296 = vlaneseq
        %v297 = vshrl.u32 %v296, 7
        %v298 = vsub.s32 %v295, %v297
        %v299 = vrot.slane %v280, %v298
        %v300 = vlaneseq
        %v301 = vshrl.u32 %v300, 7
        %v302 = vsub.s32 %v295, %v301
        %v303 = vrot.slane %v283, %v302
        %v304 = vlaneseq
        %v305 = vshrl.u32 %v304, 7
        %v306 = vsub.s32 %v295, %v305
        %v307 = vrot.slane %v286, %v306
        %v308 = vlaneseq
        %v309 = vshrl.u32 %v308, 7
        %v310 = vsub.s32 %v295, %v309
        %v311 = vrot.slane %v289, %v310
        %vm312 = vcmask 1041409
        %v313 = vsel %vm312, %v303, %v299
        %vm314 = vcmask 1042434
        %v315 = vsel %vm314, %v307, %v313
        %vm316 = vcmask 1043459
        %v317 = vsel %vm316, %v311, %v315
        %vm319 = vcmask 11264
        %v320 = vsel %vm319, %v317, 0.0
        %321 = vadd.xlane.f32.xlu0 %v320
        %v322 = vpop.xlane.xlu0 %321
        %v323 = vadd.f32 %v258, %v270
        %v324 = vadd.f32 %v259, %v271
        %v325 = vadd.f32 %v260, %v272
        %v326 = vadd.f32 %v261, %v273
        %v327 = vsel %vm230, %v323, 0.0
        %328 = vadd.xlane.f32.xlu0 %v327
        %v329 = vpop.xlane.xlu0 %328
        %v330 = vsel %vm230, %v324, 0.0
        %331 = vadd.xlane.f32.xlu0 %v330
        %v332 = vpop.xlane.xlu0 %331
        %v333 = vsel %vm230, %v325, 0.0
        %334 = vadd.xlane.f32.xlu0 %v333
        %v335 = vpop.xlane.xlu0 %334
        %v336 = vsel %vm230, %v326, 0.0
        %337 = vadd.xlane.f32.xlu0 %v336
        %v338 = vpop.xlane.xlu0 %337
        %v343 = vlaneseq
        %v344 = vshrl.u32 %v343, 7
        %v345 = vsub.s32 %v295, %v344
        %v346 = vrot.slane %v329, %v345
        %v347 = vlaneseq
        %v348 = vshrl.u32 %v347, 7
        %v349 = vsub.s32 %v295, %v348
        %v350 = vrot.slane %v332, %v349
        %v351 = vlaneseq
        %v352 = vshrl.u32 %v351, 7
        %v353 = vsub.s32 %v295, %v352
        %v354 = vrot.slane %v335, %v353
        %v355 = vlaneseq
        %v356 = vshrl.u32 %v355, 7
        %v357 = vsub.s32 %v295, %v356
        %v358 = vrot.slane %v338, %v357
        %v359 = vsel %vm312, %v350, %v346
        %v360 = vsel %vm314, %v354, %v359
        %v361 = vsel %vm316, %v358, %v360
        %v363 = vsel %vm319, %v361, 0.0
        %364 = vadd.xlane.f32.xlu0 %v363
        %v365 = vpop.xlane.xlu0 %364
        %vm366 = vcmask 3072
        %367 = vst.msk [vmem:[%s224] sm:$0xf] %vm366, %v322
        %vm368 = vcmask 11272
        %369 = vst.msk [vmem:[%s224] sm:$0xf] %vm368, %v365
        %p370 = scmp.lt.s32.totalorder %s23, 1
        %s371 = scalar_select %p370, %s23, 1
        %p372 = scmp.lt.s32.totalorder %s24, 0
        %s373 = scalar_select %p372, %s24, 0
        %s374 = sadd.s32 %s373, %s371
        %s375 = smul.addr %s374, 4
        %s376 = scalar_lea.vmem %s2, %s375
        // Predicated region
        $region37: #{tpu_custom_call.1} parent=27 // pred_check
          %p377 = pneg %p107
        $region38: #{tpu_custom_call.1} parent=27 // pred_check_branch
          %379 = sbr.rel (%p377) target = $region40
        $region39: #{tpu_custom_call.1} parent=27 // pred_region
          _
        $region40: #{tpu_custom_call.1} parent=27 // pred_fallthru
          _
      $region28: #{tpu_custom_call.1} parent=5 // pred_fallthru
        _
      %p380 = scmp.le.s32.totalorder 2, %s14
      // Predicated region
      $region41: #{tpu_custom_call.1} parent=5 // pred_check
        %p381 = pneg %p380
      $region42: #{tpu_custom_call.1} parent=5 // pred_check_branch
        %383 = sbr.rel (%p381) target = $region44
      $region43: #{tpu_custom_call.1} parent=5 // pred_region
        %s384 = ssub.s32 %s14, 2
        // Predicated region
        $region45: #{tpu_custom_call.1} parent=43 // pred_check
          %p385 = pneg %p113
        $region46: #{tpu_custom_call.1} parent=43 // pred_check_branch
          %387 = sbr.rel (%p385) target = $region48
        $region47: #{tpu_custom_call.1} parent=43 // pred_region
          %p388 = scmp.lt.s32.totalorder %s25, 1
          %s389 = scalar_select %p388, %s25, 1
          %p390 = scmp.lt.s32.totalorder %s26, 0
          %s391 = scalar_select %p390, %s26, 0
          %s392 = sadd.s32 %s391, %s389
          %s393 = smul.addr %s392, 4
          %s394 = scalar_lea.vmem %s2, %s393
        $region48: #{tpu_custom_call.1} parent=43 // pred_fallthru
          _
      $region44: #{tpu_custom_call.1} parent=5 // pred_fallthru
        _
    $region6: #{tpu_custom_call.1} parent=1 // loop_footer
      %s18 = sadd.s32 1, %s14
    $region7: #{tpu_custom_call.1} parent=1 // loop_footer_branch
      %13 = sbr.rel target = $region3
    $region8: #{tpu_custom_call.1} parent=1 // loop_exit
      _
    %395 = vsyncpa [#allocation3], 1
    %s396 = scalar_lea.sflag [#allocation3], 1
    %397 = vsyncpa %s396, 1
    %398 = vsyncpa [#allocation5], 1
    %s399 = scalar_lea.sflag [#allocation5], 1
    %400 = vsyncpa %s399, 1

</llo_original>
